<compile_context>
chip_gen: v5e
topology: v5e:2x2
jax: 0.10.0
libtpu: 0.0.40
codegen_flags: <defaults>
</compile_context>

<pallas_src>
import jax
import jax.numpy as jnp
import numpy as np
from jax.experimental import pallas as pl
from jax.experimental.pallas import tpu as pltpu

_LANE = 128
_BF16_ROWS = 16   # bf16 packs 16 rows per sublane-packed vreg


def _cdiv(a, b):
    return -(-a // b)


def _round_up(n, m):
    return ((n + m - 1) // m) * m


def _pad_to(a, shape, value=0.0):
    pads = [(0, t - s) for s, t in zip(a.shape, shape)]
    if all(p == (0, 0) for p in pads):
        return a
    return jnp.pad(a, pads, constant_values=value)


def _gated_mlp_kernel(x_ref, w1_ref, b1_ref, w2_ref, b2_ref, w3_ref, b3_ref,
                      o_ref):
    """One batch tile: 3 bf16 MXU matmuls (f32 accum) + folded-gate bias + relu."""
    x = x_ref[...].astype(w1_ref.dtype)                       # f32 -> bf16 in-register
    h1 = jnp.dot(x, w1_ref[...], preferred_element_type=jnp.float32)
    h1 = jnp.maximum(h1 + b1_ref[...], 0.0)                   # gate folded into w1/b1
    h2 = jnp.dot(h1.astype(w2_ref.dtype), w2_ref[...],
                 preferred_element_type=jnp.float32)
    h2 = jnp.maximum(h2 + b2_ref[...], 0.0)                   # gate folded into w2/b2
    y = jnp.dot(h2.astype(w3_ref.dtype), w3_ref[...],
                preferred_element_type=jnp.float32) + b3_ref[...]
    o_ref[...] = y.astype(o_ref.dtype)


def prepare_gated_net(params, embeddings, compute_dtype=jnp.bfloat16,
                      lane_multiple=_LANE):
    """One-time prep: transpose weights to (in, out), fold the affine gates
    into the weights/biases in f32, pad hidden dims to `lane_multiple`
    (128; 256 can pay off on v6e/v7x 256x256 MXUs when real hidden sizes are
    >= ~200), and cast MXU operands to `compute_dtype`.

    Folding uses (x @ W^T + b) * g + beta == x @ (W^T * g) + (b * g + beta),
    exact in f32; it adds one bf16 rounding of the scaled weights (well within
    the stated tolerance).
    """
    w1 = params["layer1_linear.weight"]   # (h1, in)
    w2 = params["layer2_linear.weight"]   # (h2, h1)
    w3 = params["output_linear.weight"]   # (out, h2)
    b1 = params["layer1_linear.bias"]
    b2 = params["layer2_linear.bias"]
    b3 = params["output_linear.bias"]

    in_w, h1 = w1.shape[1], w1.shape[0]
    h2, out_w = w2.shape[0], w3.shape[0]

    def _split_emb(e, width, name):
        e = jnp.asarray(e)
        if e.ndim == 1:
            e = e[None, :]
        assert e.shape == (1, 2 * width), (
            f"{name}: expected broadcast embedding of shape (1, {2 * width}), "
            f"got {tuple(e.shape)}; per-example embeddings would need "
            "batch-tiled gate inputs")
        return e[0, :width].astype(jnp.float32) + 1.0, e[0, width:].astype(jnp.float32)

    # condition_order='low2high': layer1 <- embeddings[-1], layer2 <- embeddings[-2]
    g1, beta1 = _split_emb(embeddings[-1], h1, "layer1")
    g2, beta2 = _split_emb(embeddings[-2], h2, "layer2")

    w1_eff = w1.T.astype(jnp.float32) * g1[None, :]
    b1_eff = b1.astype(jnp.float32) * g1 + beta1
    w2_eff = w2.T.astype(jnp.float32) * g2[None, :]
    b2_eff = b2.astype(jnp.float32) * g2 + beta2

    h1_p = _round_up(h1, lane_multiple)
    h2_p = _round_up(h2, lane_multiple)
    # Zero-padding is safe with the folded gate: padded hidden units get
    # weight 0 and bias 0 -> relu(0) = 0 and contribute nothing downstream.
    prep = dict(
        w1=_pad_to(w1_eff, (in_w, h1_p)).astype(compute_dtype),
        b1=_pad_to(b1_eff[None, :], (1, h1_p)),
        w2=_pad_to(w2_eff, (h1_p, h2_p)).astype(compute_dtype),
        b2=_pad_to(b2_eff[None, :], (1, h2_p)),
        w3=_pad_to(w3.T.astype(jnp.float32), (h2_p, out_w)).astype(compute_dtype),
        b3=b3.astype(jnp.float32)[None, :],
    )
    meta = dict(in_w=in_w, h1_p=h1_p, h2_p=h2_p, out_w=out_w,
                compute_dtype=compute_dtype)
    return prep, meta


def _choose_batch_tiling(B, max_tile_b=1024, min_grid=2):
    """Batch tile: multiple of 16 rows (bf16 packing), grid >= min_grid when B
    allows (v7x megacore), padding bounded by ~16 rows per grid step."""
    b_req = _round_up(B, _BF16_ROWS)
    n = max(min_grid, _cdiv(B, max_tile_b))
    if n % 2:
        n += 1                                  # even split across 2 TensorCores
    tb = min(_round_up(_cdiv(B, n), _BF16_ROWS), b_req)
    b_pad = _round_up(B, tb)
    return tb, b_pad


def gated_net_forward(x, prep, meta, *, max_tile_b=1024, out_dtype=jnp.float32):
    """x: (B, input_size) float32.  Returns (B, output_size) `out_dtype`."""
    B = x.shape[0]
    in_w, h1_p, h2_p, out_w = meta["in_w"], meta["h1_p"], meta["h2_p"], meta["out_w"]
    assert x.shape[1] == in_w, (x.shape, in_w)
    if x.dtype not in (jnp.float32, meta["compute_dtype"]):
        x = x.astype(jnp.float32)

    tb, b_pad = _choose_batch_tiling(B, max_tile_b)
    x_p = _pad_to(x, (b_pad, in_w))             # rows only; dtype untouched

    def resident(shape):
        # Constant block index -> DMA'd once, stays VMEM-resident across the grid.
        return pl.BlockSpec(shape, lambda i: (0, 0))

    # Explicit VMEM budget (double-buffered x/out + resident weights/biases +
    # f32 intermediates) with headroom; documents the v7x (64 MiB) derivation.
    in_lanes = _round_up(in_w, _LANE)
    out_lanes = _round_up(out_w, _LANE)
    vmem_bytes = (
        2 * tb * in_lanes * 4
        + 2 * tb * out_lanes * 4
        + 2 * 2 * (in_w * h1_p + h1_p * h2_p + h2_p * out_w)
        + 2 * 3 * 8 * max(h1_p, h2_p, out_lanes) * 4
        + 2 * 2 * tb * max(h1_p, h2_p) * 4)
    vmem_limit = int(min(64 << 20, max(16 << 20, vmem_bytes + (4 << 20))))

    flops = 2 * b_pad * (in_w * h1_p + h1_p * h2_p + h2_p * out_w)
    bytes_accessed = int(
        b_pad * in_w * x_p.dtype.itemsize
        + sum(int(np.prod(v.shape)) * v.dtype.itemsize for v in prep.values())
        + b_pad * out_w * np.dtype(out_dtype).itemsize)

    y = pl.pallas_call(
        _gated_mlp_kernel,
        out_shape=jax.ShapeDtypeStruct((b_pad, out_w), out_dtype),
        grid=(b_pad // tb,),
        in_specs=[
            pl.BlockSpec((tb, in_w), lambda i: (i, 0)),      # x: batch-tiled
            resident((in_w, h1_p)), resident((1, h1_p)),     # w1', b1' (gate folded)
            resident((h1_p, h2_p)), resident((1, h2_p)),     # w2', b2' (gate folded)
            resident((h2_p, out_w)), resident((1, out_w)),   # w3,  b3
        ],
        out_specs=pl.BlockSpec((tb, out_w), lambda i: (i, 0)),
        compiler_params=pltpu.CompilerParams(
            dimension_semantics=("parallel",),
            vmem_limit_bytes=vmem_limit),
        cost_estimate=pl.CostEstimate(
            flops=flops, transcendentals=0, bytes_accessed=bytes_accessed),
    )(x_p, prep["w1"], prep["b1"], prep["w2"], prep["b2"],
      prep["w3"], prep["b3"])

    return y if b_pad == B else y[:B]


def _reference_forward(x, params, embeddings):
    """Pure-JAX f32 reference replicating the PyTorch forward."""
    def affine(h, e):
        n = h.shape[-1]
        gammas, betas = e[:, :n], e[:, n:]
        return h * (gammas + 1.0) + betas

    e1, e2 = embeddings[-1], embeddings[-2]
    h = x @ params["layer1_linear.weight"].T + params["layer1_linear.bias"]
    h = jax.nn.relu(affine(h, e1))
    h = h @ params["layer2_linear.weight"].T + params["layer2_linear.bias"]
    h = jax.nn.relu(affine(h, e2))
    return h @ params["output_linear.weight"].T + params["output_linear.bias"]


if __name__ == "__main__":
    batch = 8
    input_size = 8
    hidden_sizes = [32, 32]
    output_size = 8

    key = jax.random.PRNGKey(0)
    keys = jax.random.split(key, 10)

    layer_sizes = [input_size] + hidden_sizes + [output_size]
    names = ["layer1_linear", "layer2_linear", "output_linear"]
    params = {}
    for i, name in enumerate(names):
        fan_in, fan_out = layer_sizes[i], layer_sizes[i + 1]
        bound = 1.0 / np.sqrt(fan_in)
        params[name + ".weight"] = jax.random.uniform(
            keys[2 * i], (fan_out, fan_in), jnp.float32, -bound, bound)
        params[name + ".bias"] = jax.random.uniform(
            keys[2 * i + 1], (fan_out,), jnp.float32, -bound, bound)

    x = jax.random.normal(keys[6], (batch, input_size), jnp.float32)
    # One embedding per gated (hidden) layer; shape (1, 2*hidden) broadcasts
    # over the batch exactly like the PyTorch affine conditional layer.
    embeddings = [
        jax.random.normal(keys[7], (1, 2 * hidden_sizes[0]), jnp.float32) * 0.1,
        jax.random.normal(keys[8], (1, 2 * hidden_sizes[1]), jnp.float32) * 0.1,
    ]

    prep, meta = prepare_gated_net(params, embeddings)
    y = gated_net_forward(x, prep, meta)
    y = jax.block_until_ready(y)

    y_ref = _reference_forward(x, params, embeddings)
    # bf16 MXU operands (f32 accumulation, gate folded into bf16 weights)
    # -> relaxed tolerance vs f32 reference.
    np.testing.assert_allclose(np.asarray(y), np.asarray(y_ref),
                               rtol=5e-2, atol=5e-2)
    print("KERNEL_OK")
</pallas_src>

<mosaic_0001>
module attributes {stable_mosaic.version = 11 : i64} {
  func.func @_gated_mlp_kernel(%arg0: i32, %arg1: memref<16x8xf32, #tpu.memory_space<vmem>>, %arg2: memref<8x128xbf16, #tpu.memory_space<vmem>>, %arg3: memref<1x128xf32, #tpu.memory_space<vmem>>, %arg4: memref<128x128xbf16, #tpu.memory_space<vmem>>, %arg5: memref<1x128xf32, #tpu.memory_space<vmem>>, %arg6: memref<128x8xbf16, #tpu.memory_space<vmem>>, %arg7: memref<1x8xf32, #tpu.memory_space<vmem>>, %arg8: memref<16x8xf32, #tpu.memory_space<vmem>>) attributes {dimension_semantics = [#tpu.dimension_semantics<parallel>], iteration_bounds = array<i64: 1>, scalar_prefetch = 0 : i64, scratch_operands = 0 : i64, tpu.core_type = #tpu.core_type<tc>, window_params = [{transform_indices = @transform_0, window_bounds = array<i64: 16, 8>}, {pipeline_mode = #tpu.pipeline_mode<synchronous>, transform_indices = @transform_1, window_bounds = array<i64: 8, 128>}, {pipeline_mode = #tpu.pipeline_mode<synchronous>, transform_indices = @transform_2, window_bounds = array<i64: 1, 128>}, {pipeline_mode = #tpu.pipeline_mode<synchronous>, transform_indices = @transform_3, window_bounds = array<i64: 128, 128>}, {pipeline_mode = #tpu.pipeline_mode<synchronous>, transform_indices = @transform_4, window_bounds = array<i64: 1, 128>}, {pipeline_mode = #tpu.pipeline_mode<synchronous>, transform_indices = @transform_5, window_bounds = array<i64: 128, 8>}, {pipeline_mode = #tpu.pipeline_mode<synchronous>, transform_indices = @transform_6, window_bounds = array<i64: 1, 8>}, {transform_indices = @transform_7, window_bounds = array<i64: 16, 8>}]} {
    %c0 = arith.constant 0 : index
    %c0_0 = arith.constant 0 : index
    %0 = vector.load %arg1[%c0, %c0_0] : memref<16x8xf32, #tpu.memory_space<vmem>>, vector<16x8xf32>
    %1 = arith.truncf %0 : vector<16x8xf32> to vector<16x8xbf16>
    %c0_1 = arith.constant 0 : index
    %c0_2 = arith.constant 0 : index
    %2 = vector.load %arg2[%c0_1, %c0_2] : memref<8x128xbf16, #tpu.memory_space<vmem>>, vector<8x128xbf16>
    %cst = arith.constant dense<0.000000e+00> : vector<16x128xf32>
    %3 = tpu.matmul %1, %2, %cst {dimension_numbers = #tpu.dot_dimension_numbers<[1], [0], [0], [1], [0, 0, 1, 1], [], []>} : vector<16x8xbf16>, vector<8x128xbf16>, vector<16x128xf32> -> vector<16x128xf32>
    %c0_3 = arith.constant 0 : index
    %c0_4 = arith.constant 0 : index
    %4 = vector.load %arg3[%c0_3, %c0_4] : memref<1x128xf32, #tpu.memory_space<vmem>>, vector<1x128xf32>
    %5 = vector.broadcast %4 : vector<1x128xf32> to vector<16x128xf32>
    %6 = arith.addf %3, %5 : vector<16x128xf32>
    %cst_5 = arith.constant 0.000000e+00 : f32
    %7 = vector.broadcast %cst_5 : f32 to vector<16x128xf32>
    %8 = arith.maximumf %6, %7 : vector<16x128xf32>
    %9 = arith.truncf %8 : vector<16x128xf32> to vector<16x128xbf16>
    %c0_6 = arith.constant 0 : index
    %c0_7 = arith.constant 0 : index
    %10 = vector.load %arg4[%c0_6, %c0_7] : memref<128x128xbf16, #tpu.memory_space<vmem>>, vector<128x128xbf16>
    %cst_8 = arith.constant dense<0.000000e+00> : vector<16x128xf32>
    %11 = tpu.matmul %9, %10, %cst_8 {dimension_numbers = #tpu.dot_dimension_numbers<[1], [0], [0], [1], [0, 0, 1, 1], [], []>} : vector<16x128xbf16>, vector<128x128xbf16>, vector<16x128xf32> -> vector<16x128xf32>
    %c0_9 = arith.constant 0 : index
    %c0_10 = arith.constant 0 : index
    %12 = vector.load %arg5[%c0_9, %c0_10] : memref<1x128xf32, #tpu.memory_space<vmem>>, vector<1x128xf32>
    %13 = vector.broadcast %12 : vector<1x128xf32> to vector<16x128xf32>
    %14 = arith.addf %11, %13 : vector<16x128xf32>
    %cst_11 = arith.constant 0.000000e+00 : f32
    %15 = vector.broadcast %cst_11 : f32 to vector<16x128xf32>
    %16 = arith.maximumf %14, %15 : vector<16x128xf32>
    %17 = arith.truncf %16 : vector<16x128xf32> to vector<16x128xbf16>
    %c0_12 = arith.constant 0 : index
    %c0_13 = arith.constant 0 : index
    %18 = vector.load %arg6[%c0_12, %c0_13] : memref<128x8xbf16, #tpu.memory_space<vmem>>, vector<128x8xbf16>
    %cst_14 = arith.constant dense<0.000000e+00> : vector<16x8xf32>
    %19 = tpu.matmul %17, %18, %cst_14 {dimension_numbers = #tpu.dot_dimension_numbers<[1], [0], [0], [1], [0, 0, 1, 1], [], []>} : vector<16x128xbf16>, vector<128x8xbf16>, vector<16x8xf32> -> vector<16x8xf32>
    %c0_15 = arith.constant 0 : index
    %c0_16 = arith.constant 0 : index
    %20 = vector.load %arg7[%c0_15, %c0_16] : memref<1x8xf32, #tpu.memory_space<vmem>>, vector<1x8xf32>
    %21 = vector.broadcast %20 : vector<1x8xf32> to vector<16x8xf32>
    %22 = arith.addf %19, %21 : vector<16x8xf32>
    %c0_17 = arith.constant 0 : index
    %c0_18 = arith.constant 0 : index
    %23 = vector.load %arg8[%c0_17, %c0_18] : memref<16x8xf32, #tpu.memory_space<vmem>>, vector<16x8xf32>
    tpu.vector_store %arg8[%c0_17, %c0_18], %22 {strides = array<i32>} : memref<16x8xf32, #tpu.memory_space<vmem>>, vector<16x8xf32>,
    return
  }
  func.func @transform_0(%arg0: i32) -> (i32, i32) {
    %c0_i32 = arith.constant 0 : i32
    %c0_i32_0 = arith.constant 0 : i32
    return %arg0, %c0_i32 : i32, i32
  }
  func.func @transform_1(%arg0: i32) -> (i32, i32) {
    %c0_i32 = arith.constant 0 : i32
    %c0_i32_0 = arith.constant 0 : i32
    %c0_i32_1 = arith.constant 0 : i32
    return %c0_i32, %c0_i32_0 : i32, i32
  }
  func.func @transform_2(%arg0: i32) -> (i32, i32) {
    %c0_i32 = arith.constant 0 : i32
    %c0_i32_0 = arith.constant 0 : i32
    %c0_i32_1 = arith.constant 0 : i32
    return %c0_i32, %c0_i32_0 : i32, i32
  }
  func.func @transform_3(%arg0: i32) -> (i32, i32) {
    %c0_i32 = arith.constant 0 : i32
    %c0_i32_0 = arith.constant 0 : i32
    %c0_i32_1 = arith.constant 0 : i32
    return %c0_i32, %c0_i32_0 : i32, i32
  }
  func.func @transform_4(%arg0: i32) -> (i32, i32) {
    %c0_i32 = arith.constant 0 : i32
    %c0_i32_0 = arith.constant 0 : i32
    %c0_i32_1 = arith.constant 0 : i32
    return %c0_i32, %c0_i32_0 : i32, i32
  }
  func.func @transform_5(%arg0: i32) -> (i32, i32) {
    %c0_i32 = arith.constant 0 : i32
    %c0_i32_0 = arith.constant 0 : i32
    %c0_i32_1 = arith.constant 0 : i32
    return %c0_i32, %c0_i32_0 : i32, i32
  }
  func.func @transform_6(%arg0: i32) -> (i32, i32) {
    %c0_i32 = arith.constant 0 : i32
    %c0_i32_0 = arith.constant 0 : i32
    %c0_i32_1 = arith.constant 0 : i32
    return %c0_i32, %c0_i32_0 : i32, i32
  }
  func.func @transform_7(%arg0: i32) -> (i32, i32) {
    %c0_i32 = arith.constant 0 : i32
    %c0_i32_0 = arith.constant 0 : i32
    return %arg0, %c0_i32 : i32, i32
  }
}

</mosaic_0001>

<llo_original>
// kernel: tpu_custom_call.1
$region0: #{tpu_custom_call.1}
  #allocation0 [shape = 'u32[]', space=smem, size = 0x4, offset = 0x4, fixed_abs, tag = 'smem constant byte address 0x4 - core index']
  #allocation1 [shape = 'u32[72,128]{1,0:T(1,128)}', space=vmem, size = 0x9000, scoped, tag = 'internal scratch']
  %s0 = inlined_call_operand.vmem [shape: f32[16,8], index: 0, kind: input, shape index: {}]
  %s1 = inlined_call_operand.vmem [shape: bf16[8,128], index: 1, kind: input, shape index: {}]
  %s2 = inlined_call_operand.vmem [shape: f32[1,128], index: 2, kind: input, shape index: {}]
  %s3 = inlined_call_operand.vmem [shape: bf16[128,128], index: 3, kind: input, shape index: {}]
  %s4 = inlined_call_operand.vmem [shape: f32[1,128], index: 4, kind: input, shape index: {}]
  %s5 = inlined_call_operand.vmem [shape: bf16[128,8], index: 5, kind: input, shape index: {}]
  %s6 = inlined_call_operand.vmem [shape: f32[1,8], index: 6, kind: input, shape index: {}]
  %s7 = inlined_call_operand.vmem [shape: f32[16,8], index: 7, kind: output, shape index: {}]
  %s8 = sld [smem:[#allocation0]]
  $region38: #{tpu_custom_call.1} parent=0
    _
  %s10 = ssub.s32 1, %s8
  %s11 = scalar_select 0, %s10, %s8
  // Predicated region
  $region2: #{tpu_custom_call.1} parent=0 // pred_check
    _
  $region3: #{tpu_custom_call.1} parent=0 // pred_check_branch
    %13 = sbr.rel (0) target = $region5
  $region4: #{tpu_custom_call.1} parent=0 // pred_region
    _
  $region5: #{tpu_custom_call.1} parent=0 // pred_fallthru
    _
  // Predicated region
  $region6: #{tpu_custom_call.1} parent=0 // pred_check
    _
  $region7: #{tpu_custom_call.1} parent=0 // pred_check_branch
    %15 = sbr.rel (0) target = $region9
  $region8: #{tpu_custom_call.1} parent=0 // pred_region
    _
  $region9: #{tpu_custom_call.1} parent=0 // pred_fallthru
    _
  // Predicated region
  $region10: #{tpu_custom_call.1} parent=0 // pred_check
    _
  $region11: #{tpu_custom_call.1} parent=0 // pred_check_branch
    %17 = sbr.rel (0) target = $region13
  $region12: #{tpu_custom_call.1} parent=0 // pred_region
    _
  $region13: #{tpu_custom_call.1} parent=0 // pred_fallthru
    _
  // Predicated region
  $region14: #{tpu_custom_call.1} parent=0 // pred_check
    _
  $region15: #{tpu_custom_call.1} parent=0 // pred_check_branch
    %19 = sbr.rel (0) target = $region17
  $region16: #{tpu_custom_call.1} parent=0 // pred_region
    _
  $region17: #{tpu_custom_call.1} parent=0 // pred_fallthru
    _
  // Predicated region
  $region18: #{tpu_custom_call.1} parent=0 // pred_check
    _
  $region19: #{tpu_custom_call.1} parent=0 // pred_check_branch
    %21 = sbr.rel (0) target = $region21
  $region20: #{tpu_custom_call.1} parent=0 // pred_region
    _
  $region21: #{tpu_custom_call.1} parent=0 // pred_fallthru
    _
  // Predicated region
  $region22: #{tpu_custom_call.1} parent=0 // pred_check
    _
  $region23: #{tpu_custom_call.1} parent=0 // pred_check_branch
    %23 = sbr.rel (0) target = $region25
  $region24: #{tpu_custom_call.1} parent=0 // pred_region
    _
  $region25: #{tpu_custom_call.1} parent=0 // pred_fallthru
    _
  // Predicated region
  $region26: #{tpu_custom_call.1} parent=0 // pred_check
    _
  $region27: #{tpu_custom_call.1} parent=0 // pred_check_branch
    %25 = sbr.rel (0) target = $region29
  $region28: #{tpu_custom_call.1} parent=0 // pred_region
    _
  $region29: #{tpu_custom_call.1} parent=0 // pred_fallthru
    _
  %v27 = vld [vmem:[%s0] sm:$0xff]
  %v28 = vld [vmem:[%s0 + $0x8] sm:$0xff]
  %v29 = vpack.c.bf16 %v28, %v27
  %v30 = vld [vmem:[%s1] sm:$0xf]
  %v31 = vld [vmem:[%s2] sm:$0x1]
  %v33 = vperm.slane %v31, 0
  %vm35 = vcmask 64512
  %v37 = vsel %vm35, %v29, 0
  %vm39 = vcmask 1043456
  %v41 = vsel %vm39, %v30, 0
  %43 = vmatpush.bf16.msra.mxu0 0
  %44 = vmatpush.bf16.msra.mxu0 0
  %45 = vmatpush.bf16.msra.mxu0 0
  %46 = vmatpush.bf16.msra.mxu0 0
  %47 = vmatpush.bf16.msra.mxu0 0
  %48 = vmatpush.bf16.msra.mxu0 0
  %49 = vmatpush.bf16.msra.mxu0 0
  %50 = vmatpush.bf16.msra.mxu0 %v41
  %51 = vmatmul.bf16.gmra.mxu0 %v37
  %v52 = vpop.f32.mrf.mxu0
  %v53 = vadd.f32 %v33, %v52
  %v54 = vpop.f32.mrf.mxu0
  %v55 = vadd.f32 %v33, %v54
  %56 = vdwg.mxu0
  %v57 = vmax.f32 %v53, 0.0
  %v58 = vmax.f32 %v55, 0.0
  %v59 = vpack.c.bf16 %v58, %v57
  %v60 = vld [vmem:[%s3] sm:$0xf]
  %v61 = vld [vmem:[%s3 + $0x4] sm:$0xf]
  %v62 = vld [vmem:[%s3 + $0x8] sm:$0xf]
  %v63 = vld [vmem:[%s3 + $0xc] sm:$0xf]
  %v64 = vld [vmem:[%s3 + $0x10] sm:$0xf]
  %v65 = vld [vmem:[%s3 + $0x14] sm:$0xf]
  %v66 = vld [vmem:[%s3 + $0x18] sm:$0xf]
  %v67 = vld [vmem:[%s3 + $0x1c] sm:$0xf]
  %v68 = vld [vmem:[%s3 + $0x20] sm:$0xf]
  %v69 = vld [vmem:[%s3 + $0x24] sm:$0xf]
  %v70 = vld [vmem:[%s3 + $0x28] sm:$0xf]
  %v71 = vld [vmem:[%s3 + $0x2c] sm:$0xf]
  %v72 = vld [vmem:[%s3 + $0x30] sm:$0xf]
  %v73 = vld [vmem:[%s3 + $0x34] sm:$0xf]
  %v74 = vld [vmem:[%s3 + $0x38] sm:$0xf]
  %v75 = vld [vmem:[%s3 + $0x3c] sm:$0xf]
  %v76 = vld [vmem:[%s4] sm:$0x1]
  %v78 = vperm.slane %v76, 0
  %v96 = vunpack.c.l.b16 %v60
  %v97 = vunpack.c.l.b16 %v61
  %v98 = vunpack.c.l.b16 %v62
  %v99 = vunpack.c.l.b16 %v63
  %v100 = vunpack.c.l.b16 %v64
  %v101 = vunpack.c.l.b16 %v65
  %v102 = vunpack.c.l.b16 %v66
  %v103 = vunpack.c.l.b16 %v67
  %v104 = vunpack.c.l.b16 %v68
  %v105 = vunpack.c.l.b16 %v69
  %v106 = vunpack.c.l.b16 %v70
  %v107 = vunpack.c.l.b16 %v71
  %v108 = vunpack.c.l.b16 %v72
  %v109 = vunpack.c.l.b16 %v73
  %v110 = vunpack.c.l.b16 %v74
  %v111 = vunpack.c.l.b16 %v75
  %v112 = vpack.c.b16 %v97, %v96
  %v113 = vpack.c.b16 %v99, %v98
  %v114 = vpack.c.b16 %v101, %v100
  %v115 = vpack.c.b16 %v103, %v102
  %v116 = vpack.c.b16 %v105, %v104
  %v117 = vpack.c.b16 %v107, %v106
  %v118 = vpack.c.b16 %v109, %v108
  %v119 = vpack.c.b16 %v111, %v110
  %128 = vmatpush.bf16.msra.mxu0 %v119
  %129 = vmatpush.bf16.msra.mxu0 %v118
  %130 = vmatpush.bf16.msra.mxu0 %v117
  %131 = vmatpush.bf16.msra.mxu0 %v116
  %132 = vmatpush.bf16.msra.mxu0 %v115
  %133 = vmatpush.bf16.msra.mxu0 %v114
  %134 = vmatpush.bf16.msra.mxu0 %v113
  %135 = vmatpush.bf16.msra.mxu0 %v112
  %136 = vmatmul.bf16.gmra.mxu0 %v59
  %v137 = vpop.f32.mrf.mxu0
  %v138 = vadd.f32 %v78, %v137
  %v139 = vpop.f32.mrf.mxu0
  %v140 = vadd.f32 %v78, %v139
  %141 = vdwg.mxu0
  %v142 = vmax.f32 %v138, 0.0
  %v143 = vmax.f32 %v140, 0.0
  %v144 = vpack.c.bf16 %v143, %v142
  %v145 = vld [vmem:[%s5] sm:$0xf]
  %v146 = vld [vmem:[%s5 + $0x4] sm:$0xf]
  %v147 = vld [vmem:[%s5 + $0x8] sm:$0xf]
  %v148 = vld [vmem:[%s5 + $0xc] sm:$0xf]
  %v149 = vld [vmem:[%s5 + $0x10] sm:$0xf]
  %v150 = vld [vmem:[%s5 + $0x14] sm:$0xf]
  %v151 = vld [vmem:[%s5 + $0x18] sm:$0xf]
  %v152 = vld [vmem:[%s5 + $0x1c] sm:$0xf]
  %v153 = vld [vmem:[%s5 + $0x20] sm:$0xf]
  %v154 = vld [vmem:[%s5 + $0x24] sm:$0xf]
  %v155 = vld [vmem:[%s5 + $0x28] sm:$0xf]
  %v156 = vld [vmem:[%s5 + $0x2c] sm:$0xf]
  %v157 = vld [vmem:[%s5 + $0x30] sm:$0xf]
  %v158 = vld [vmem:[%s5 + $0x34] sm:$0xf]
  %v159 = vld [vmem:[%s5 + $0x38] sm:$0xf]
  %v160 = vld [vmem:[%s5 + $0x3c] sm:$0xf]
  %v161 = vld [vmem:[%s6] sm:$0x1]
  %v163 = vperm.slane %v161, 0
  %v181 = vunpack.c.l.b16 %v145
  %v182 = vunpack.c.l.b16 %v146
  %v183 = vunpack.c.l.b16 %v147
  %v184 = vunpack.c.l.b16 %v148
  %v185 = vunpack.c.l.b16 %v149
  %v186 = vunpack.c.l.b16 %v150
  %v187 = vunpack.c.l.b16 %v151
  %v188 = vunpack.c.l.b16 %v152
  %v189 = vunpack.c.l.b16 %v153
  %v190 = vunpack.c.l.b16 %v154
  %v191 = vunpack.c.l.b16 %v155
  %v192 = vunpack.c.l.b16 %v156
  %v193 = vunpack.c.l.b16 %v157
  %v194 = vunpack.c.l.b16 %v158
  %v195 = vunpack.c.l.b16 %v159
  %v196 = vunpack.c.l.b16 %v160
  %v197 = vpack.c.b16 %v182, %v181
  %v198 = vpack.c.b16 %v184, %v183
  %v199 = vpack.c.b16 %v186, %v185
  %v200 = vpack.c.b16 %v188, %v187
  %v201 = vpack.c.b16 %v190, %v189
  %v202 = vpack.c.b16 %v192, %v191
  %v203 = vpack.c.b16 %v194, %v193
  %v204 = vpack.c.b16 %v196, %v195
  %213 = vmatpush.bf16.msra.mxu0 %v204
  %214 = vmatpush.bf16.msra.mxu0 %v203
  %215 = vmatpush.bf16.msra.mxu0 %v202
  %216 = vmatpush.bf16.msra.mxu0 %v201
  %217 = vmatpush.bf16.msra.mxu0 %v200
  %218 = vmatpush.bf16.msra.mxu0 %v199
  %219 = vmatpush.bf16.msra.mxu0 %v198
  %220 = vmatpush.bf16.msra.mxu0 %v197
  %221 = vmatmul.bf16.gmra.mxu0 %v144
  %v222 = vpop.f32.mrf.mxu0
  %v223 = vadd.f32 %v163, %v222
  %v224 = vpop.f32.mrf.mxu0
  %v225 = vadd.f32 %v163, %v224
  %226 = vdwg.mxu0
  %227 = vst.msk [vmem:[%s7] sm:$0xff] %vm35, %v223
  %228 = vst.msk [vmem:[%s7 + $0x8] sm:$0xff] %vm35, %v225
  // Predicated region
  $region30: #{tpu_custom_call.1} parent=0 // pred_check
    _
  $region31: #{tpu_custom_call.1} parent=0 // pred_check_branch
    %230 = sbr.rel (0) target = $region33
  $region32: #{tpu_custom_call.1} parent=0 // pred_region
    _
  $region33: #{tpu_custom_call.1} parent=0 // pred_fallthru
    _
  // Predicated region
  $region34: #{tpu_custom_call.1} parent=0 // pred_check
    _
  $region35: #{tpu_custom_call.1} parent=0 // pred_check_branch
    %232 = sbr.rel (0) target = $region37
  $region36: #{tpu_custom_call.1} parent=0 // pred_region
    _
  $region37: #{tpu_custom_call.1} parent=0 // pred_fallthru
    _

</llo_original>
